<compile_context>
chip_gen: v5e
topology: v5e:2x2
jax: 0.10.0
libtpu: 0.0.40
codegen_flags: <defaults>
</compile_context>

<pallas_src>
import functools

import jax
import jax.numpy as jnp
from jax import lax
from jax.experimental import pallas as pl
from jax.experimental.pallas import tpu as pltpu


def _skipgram_matmul_kernel(x_ref, w_ref, b_ref, o_ref, *, tv, w_resident):
    """Compute one (tm, tv) logits tile: o = x @ w_tile.T + b_tile.

    x_ref : (tm, D)   renormalized embedding rows, MXU dtype (e.g. bf16)
    w_ref : (V, D) if w_resident else (tv, D)   linear weight, PyTorch layout
    b_ref : (1, tv)   bias tile (f32)
    o_ref : (tm, tv)  logits tile
    """
    if w_resident:
        j = pl.program_id(1)
        start = pl.multiple_of(j * tv, tv)
        w = w_ref[pl.ds(start, tv), :]          # slice the VMEM-resident weight
    else:
        w = w_ref[...]

    logits = lax.dot_general(
        x_ref[...], w,
        dimension_numbers=(((1,), (1,)), ((), ())),   # x @ w.T  (rhs-transposed)
        preferred_element_type=jnp.float32)
    o_ref[...] = (logits + b_ref[...]).astype(o_ref.dtype)


def skipgram_forward(indices, emb_table, lin_w, lin_b, *, max_norm,
                     tm=512, tv=1024,
                     mxu_dtype=jnp.bfloat16, out_dtype=jnp.float32,
                     resident_w_bytes=16 << 20):
    """SkipGram forward.

    indices: (B, T) int; emb_table: (V, D); lin_w: (V, D) PyTorch layout; lin_b: (V,)
    Returns logits of shape (B, T, V) in out_dtype.
    """
    B, T = indices.shape
    V, D = emb_table.shape
    M = B * T
    assert D % 128 == 0, "embed_dim must be a multiple of 128 for lane alignment"

    # ---- Embedding gather + max_norm renorm, hoisted off the kernel critical path.
    # Cost is only M*D elements -- negligible next to the M*V logits stream.
    x = jnp.take(emb_table, indices.reshape(-1), axis=0).astype(jnp.float32)
    norm = jnp.sqrt(jnp.sum(x * x, axis=-1, keepdims=True))
    scale = jnp.where(norm > max_norm, max_norm / (norm + 1e-7), 1.0)
    x = (x * scale).astype(mxu_dtype)                 # (M, D), stored once in MXU dtype
    w = lin_w.astype(mxu_dtype)                       # (V, D), PyTorch layout
    b2 = lin_b.reshape(1, V).astype(jnp.float32)      # (1, V)

    # ---- Tile selection.
    tm = min(tm, M)
    tv = min(tv, V)
    # Prefer >= 2 blocks on the parallel (M) axis so both v7x TensorCores get work.
    if M // tm < 2 and M >= 16 and (M // 2) % 8 == 0:
        tm = M // 2
    assert M % tm == 0 and (tm % 8 == 0 or tm == M), (M, tm)
    assert V % tv == 0 and (tv % 128 == 0 or tv == V), (V, tv)

    w_itemsize = jnp.dtype(mxu_dtype).itemsize
    w_resident = V * D * w_itemsize <= resident_w_bytes

    if w_resident:
        # Constant block index => the full weight is DMA'd into VMEM exactly once.
        w_spec = pl.BlockSpec((V, D), lambda i, j: (0, 0))
    else:
        w_spec = pl.BlockSpec((tv, D), lambda i, j: (j, 0))

    grid = (M // tm, V // tv)

    # ---- Explicit VMEM budget (v7x: 64 MiB physical, 32 MiB default scoped).
    out_itemsize = jnp.dtype(out_dtype).itemsize
    needed = (2 * tm * D * w_itemsize                                   # x tile (2 bufs)
              + (2 * V * D * w_itemsize if w_resident                   # resident W
                 else 2 * tv * D * w_itemsize)                          # or streamed W
              + 2 * tm * tv * out_itemsize                              # out tile (2 bufs)
              + 2 * tv * 4)                                             # bias tile
    vmem_limit = int(min(max(needed * 5 // 4 + (2 << 20), 32 << 20), 64 << 20))

    out = pl.pallas_call(
        functools.partial(_skipgram_matmul_kernel, tv=tv, w_resident=w_resident),
        out_shape=jax.ShapeDtypeStruct((M, V), out_dtype),
        grid=grid,
        in_specs=[
            pl.BlockSpec((tm, D), lambda i, j: (i, 0)),   # activations; reused across j
            w_spec,                                       # linear weight
            pl.BlockSpec((1, tv), lambda i, j: (0, j)),   # bias vocab tile
        ],
        out_specs=pl.BlockSpec((tm, tv), lambda i, j: (i, j)),
        compiler_params=pltpu.CompilerParams(
            dimension_semantics=("parallel", "arbitrary"),
            vmem_limit_bytes=vmem_limit),
    )(x, w, b2)

    return out.reshape(B, T, V)


def _reference_f32(indices, emb_table, lin_w, lin_b, max_norm):
    """PyTorch-semantics reference in f32."""
    x = jnp.take(emb_table, indices.reshape(-1), axis=0).astype(jnp.float32)
    norm = jnp.sqrt(jnp.sum(x * x, axis=-1, keepdims=True))
    scale = jnp.where(norm > max_norm, max_norm / (norm + 1e-7), 1.0)
    x = x * scale
    y = x @ lin_w.astype(jnp.float32).T + lin_b.astype(jnp.float32)
    return y.reshape(indices.shape + (lin_w.shape[0],))


def _reference_bf16_operands(indices, emb_table, lin_w, lin_b, max_norm):
    """Reference with bf16-quantized matmul operands (matches kernel MXU precision)."""
    x = jnp.take(emb_table, indices.reshape(-1), axis=0).astype(jnp.float32)
    norm = jnp.sqrt(jnp.sum(x * x, axis=-1, keepdims=True))
    scale = jnp.where(norm > max_norm, max_norm / (norm + 1e-7), 1.0)
    xq = (x * scale).astype(jnp.bfloat16).astype(jnp.float32)
    wq = lin_w.astype(jnp.bfloat16).astype(jnp.float32)
    y = xq @ wq.T + lin_b.astype(jnp.float32)
    return y.reshape(indices.shape + (lin_w.shape[0],))


if __name__ == "__main__":
    vocab_size = 256
    embed_dim = 128          # max_norm = embed_dim, per the module __init__
    B, T = 2, 8

    key = jax.random.PRNGKey(0)
    k_idx, k_emb, k_w, k_b = jax.random.split(key, 4)

    indices = jax.random.randint(k_idx, (B, T), 0, vocab_size, dtype=jnp.int32)
    emb_table = jax.random.normal(k_emb, (vocab_size, embed_dim), dtype=jnp.float32)

    # Force one looked-up row over max_norm so the renorm branch is exercised.
    indices = indices.at[0, 0].set(5)
    emb_table = emb_table.at[5].multiply(30.0)

    bound = 1.0 / (embed_dim ** 0.5)
    lin_w = jax.random.uniform(k_w, (vocab_size, embed_dim), jnp.float32, -bound, bound)
    lin_b = jax.random.uniform(k_b, (vocab_size,), jnp.float32, -bound, bound)

    out = skipgram_forward(indices, emb_table, lin_w, lin_b,
                           max_norm=float(embed_dim))
    out = jax.block_until_ready(out)
    assert out.shape == (B, T, vocab_size)

    # Tight check against a reference that uses the same (bf16) matmul operand
    # precision as the kernel's MXU path.
    ref_q = _reference_bf16_operands(indices, emb_table, lin_w, lin_b, float(embed_dim))
    err_q = float(jnp.max(jnp.abs(out - ref_q)))
    assert jnp.allclose(out, ref_q, atol=1e-2, rtol=1e-3), f"bf16-ref max_err={err_q}"

    # Looser check against the full-f32 PyTorch-semantics reference (tolerance
    # reflects bf16 MXU operands; accumulation is f32).
    ref_f = _reference_f32(indices, emb_table, lin_w, lin_b, float(embed_dim))
    err_f = float(jnp.max(jnp.abs(out - ref_f)))
    assert jnp.allclose(out, ref_f, atol=1.5e-1, rtol=2e-2), f"f32-ref max_err={err_f}"

    print("KERNEL_OK")
</pallas_src>

<mosaic_0001>
module attributes {stable_mosaic.version = 11 : i64} {
  func.func @_skipgram_matmul_kernel(%arg0: i32, %arg1: i32, %arg2: memref<8x128xbf16, #tpu.memory_space<vmem>>, %arg3: memref<256x128xbf16, #tpu.memory_space<vmem>>, %arg4: memref<1x256xf32, #tpu.memory_space<vmem>>, %arg5: memref<8x256xf32, #tpu.memory_space<vmem>>) attributes {dimension_semantics = [#tpu.dimension_semantics<parallel>, #tpu.dimension_semantics<arbitrary>], iteration_bounds = array<i64: 2, 1>, scalar_prefetch = 0 : i64, scratch_operands = 0 : i64, tpu.core_type = #tpu.core_type<tc>, window_params = [{transform_indices = @transform_0, window_bounds = array<i64: 8, 128>}, {pipeline_mode = #tpu.pipeline_mode<synchronous>, transform_indices = @transform_1, window_bounds = array<i64: 256, 128>}, {transform_indices = @transform_2, window_bounds = array<i64: 1, 256>}, {transform_indices = @transform_3, window_bounds = array<i64: 8, 256>}]} {
    %c256_i32 = arith.constant 256 : i32
    %0 = arith.muli %arg1, %c256_i32 : i32
    %1 = tpu.assume_multiple %0, 256 : i32
    %2 = arith.index_cast %1 : i32 to index
    %c0 = arith.constant 0 : index
    %3 = vector.load %arg3[%2, %c0] : memref<256x128xbf16, #tpu.memory_space<vmem>>, vector<256x128xbf16>
    %c0_0 = arith.constant 0 : index
    %c0_1 = arith.constant 0 : index
    %4 = vector.load %arg2[%c0_0, %c0_1] : memref<8x128xbf16, #tpu.memory_space<vmem>>, vector<8x128xbf16>
    %cst = arith.constant dense<0.000000e+00> : vector<8x256xf32>
    %5 = tpu.matmul %4, %3, %cst {dimension_numbers = #tpu.dot_dimension_numbers<[1], [1], [0], [0], [0, 0, 1, 0], [], []>} : vector<8x128xbf16>, vector<256x128xbf16>, vector<8x256xf32> -> vector<8x256xf32>
    %c0_2 = arith.constant 0 : index
    %c0_3 = arith.constant 0 : index
    %6 = vector.load %arg4[%c0_2, %c0_3] : memref<1x256xf32, #tpu.memory_space<vmem>>, vector<1x256xf32>
    %7 = vector.broadcast %6 : vector<1x256xf32> to vector<8x256xf32>
    %8 = arith.addf %5, %7 : vector<8x256xf32>
    %c0_4 = arith.constant 0 : index
    %c0_5 = arith.constant 0 : index
    %9 = vector.load %arg5[%c0_4, %c0_5] : memref<8x256xf32, #tpu.memory_space<vmem>>, vector<8x256xf32>
    tpu.vector_store %arg5[%c0_4, %c0_5], %8 {strides = array<i32>} : memref<8x256xf32, #tpu.memory_space<vmem>>, vector<8x256xf32>,
    return
  }
  func.func @transform_0(%arg0: i32, %arg1: i32) -> (i32, i32) {
    %c0_i32 = arith.constant 0 : i32
    %c0_i32_0 = arith.constant 0 : i32
    return %arg0, %c0_i32 : i32, i32
  }
  func.func @transform_1(%arg0: i32, %arg1: i32) -> (i32, i32) {
    %c0_i32 = arith.constant 0 : i32
    %c0_i32_0 = arith.constant 0 : i32
    %c0_i32_1 = arith.constant 0 : i32
    return %c0_i32, %c0_i32_0 : i32, i32
  }
  func.func @transform_2(%arg0: i32, %arg1: i32) -> (i32, i32) {
    %c0_i32 = arith.constant 0 : i32
    %c0_i32_0 = arith.constant 0 : i32
    return %c0_i32, %arg1 : i32, i32
  }
  func.func @transform_3(%arg0: i32, %arg1: i32) -> (i32, i32) {
    %c0_i32 = arith.constant 0 : i32
    return %arg0, %arg1 : i32, i32
  }
}

</mosaic_0001>

<llo_original>
// kernel: tpu_custom_call.1
$region0: #{tpu_custom_call.1}
  #allocation0 [shape = 'u32[]', space=smem, size = 0x4, offset = 0x4, fixed_abs, tag = 'smem constant byte address 0x4 - core index']
  #allocation1 [shape = 'u32[72,128]{1,0:T(1,128)}', space=vmem, size = 0x9000, scoped, tag = 'internal scratch']
  %s0 = inlined_call_operand.hbm [shape: bf16[16,128], index: 0, kind: input, shape index: {}]
  %s1 = inlined_call_operand.hbm [shape: bf16[256,128], index: 1, kind: input, shape index: {}]
  %s2 = inlined_call_operand.hbm [shape: f32[1,256], index: 2, kind: input, shape index: {}]
  %s3 = inlined_call_operand.hbm [shape: f32[16,256], index: 3, kind: output, shape index: {}]
  %s4 = sld [smem:[#allocation0]]
  $region57: #{tpu_custom_call.1} parent=0
    _
  %s6 = ssub.s32 1, %s4
  %s7 = scalar_select 0, %s6, %s4
  $region1: #{tpu_custom_call.1} parent=0
    #allocation2 [shape = 'u8[4096]{0}', space=vmem, size = 0x1000, scoped, tag = 'input window, operand 0']
    #allocation3 [shape = 's32[2]{0}', space=sflag, size = 0x8, scoped, tag = 'scoped memory for tpu_custom_call.1']
    #allocation4 [shape = 's32[2]{0}', space=sflag, size = 0x8, scoped, tag = 'scoped memory for tpu_custom_call.1']
    #allocation5 [shape = 'u8[65536]{0}', space=vmem, size = 0x10000, scoped, tag = 'input window, operand 1, single buffered']
    #allocation6 [shape = 's32[1]{0}', space=sflag, size = 0x4, scoped, tag = 'scoped memory for tpu_custom_call.1']
    #allocation7 [shape = 'u8[1024]{0}', space=vmem, size = 0x400, scoped, tag = 'input window, operand 2, single buffered']
    #allocation8 [shape = 'u8[16384]{0}', space=vmem, size = 0x4000, scoped, tag = 'output window, operand 0']
    %8 = vsyncpa [#allocation3], 0
    %s9 = scalar_lea.sflag [#allocation3], 1
    %10 = vsyncpa %s9, 0
    %11 = vsyncpa [#allocation6], 0
    %12 = vsyncpa [#allocation4], 0
    %s13 = scalar_lea.sflag [#allocation4], 1
    %14 = vsyncpa %s13, 0
    loop: start=0, step=1, limit=4
    $region2: #{tpu_custom_call.1} parent=1 // loop_pre_header
      _
    $region3: #{tpu_custom_call.1} parent=1 // loop_header
      %s16 = sphi 0, %s20
      %p17 = scmp.ge.s32.totalorder %s16, 4
      %s23 = sphi 0, %s35
      %s24 = sphi 0, %s31
      %s25 = sphi 0, %s23
      %s26 = sphi 0, %s24
      %s27 = sphi 0, %s25
      %s28 = sphi 0, %s26
      %s38 = sphi 0, %s40
      %s41 = sphi 0, %s38
      %s42 = sphi 0, %s41
      %s58 = sphi 0, %s42
      %s62 = sphi 0, %s62
      %s64 = sphi 0, %s62
      %s65 = sphi 0, %s64
      %s79 = sphi 0, %s65
      %s85 = sphi 0, %s87
      %s88 = sphi 0, %s85
      %s89 = sphi 0, %s88
      %s105 = sphi 0, %s89
      %s113 = sphi 0, %s115
      %s116 = sphi 0, %s113
      %s117 = sphi 0, %s116
      %s133 = sphi 0, %s117
    $region4: #{tpu_custom_call.1} parent=1 // loop_header_branch
      %19 = sbr.rel (%p17) target = $region8
    $region5: #{tpu_custom_call.1} parent=1 // loop_body
      %s21 = ssub.s32 %s16, 1
      %s22 = ssub.s32 %s16, 2
      %s29 = sadd.s32 1, %s24
      %p30 = scmp.ge.s32.totalorder %s29, 1
      %s31 = scalar_select %p30, 0, %s29
      %s32 = sadd.s32 1, %s23
      %s33 = scalar_select %p30, %s32, %s23
      %p34 = scmp.ge.s32.totalorder %s33, 2
      %s35 = scalar_select %p34, 0, %s33
      %s36 = ssub.s32 %s23, %s35
      %p37 = scmp.eq.s32.totalorder %s36, 0
      %s39 = sadd.s32 %s38, 1
      %s40 = scalar_select %p37, %s38, %s39
      %p43 = pneg %p37
      %p44 = scmp.eq.s32.totalorder %s16, 1
      %p45 = por %p43, %p44
      %p46 = scmp.ne.s32.totalorder %s38, %s41
      %p47 = scmp.eq.s32.totalorder %s16, 0
      %p48 = por %p46, %p47
      %p49 = scmp.ne.s32.totalorder %s38, %s41
      %p50 = scmp.eq.s32.totalorder %s21, 1
      %p51 = por %p49, %p50
      %p52 = scmp.ne.s32.totalorder %s41, %s42
      %p53 = scmp.eq.s32.totalorder %s21, 0
      %p54 = por %p52, %p53
      %p55 = scmp.ne.s32.totalorder %s41, %s42
      %p56 = scmp.eq.s32.totalorder %s22, 1
      %p57 = por %p55, %p56
      %p59 = scmp.ne.s32.totalorder %s42, %s58
      %p60 = scmp.eq.s32.totalorder %s22, 0
      %p61 = por %p59, %p60
      %s63 = sadd.s32 %s62, 1
      %p66 = scmp.eq.s32.totalorder %s16, 1
      %p67 = scmp.ne.s32.totalorder %s62, %s64
      %p68 = scmp.eq.s32.totalorder %s16, 0
      %p69 = por %p67, %p68
      %p70 = scmp.ne.s32.totalorder %s62, %s64
      %p71 = scmp.eq.s32.totalorder %s21, 1
      %p72 = por %p70, %p71
      %p73 = scmp.ne.s32.totalorder %s64, %s65
      %p74 = scmp.eq.s32.totalorder %s21, 0
      %p75 = por %p73, %p74
      %p76 = scmp.ne.s32.totalorder %s64, %s65
      %p77 = scmp.eq.s32.totalorder %s22, 1
      %p78 = por %p76, %p77
      %p80 = scmp.ne.s32.totalorder %s65, %s79
      %p81 = scmp.eq.s32.totalorder %s22, 0
      %p82 = por %p80, %p81
      %s83 = ssub.s32 %s24, %s31
      %p84 = scmp.eq.s32.totalorder %s83, 0
      %s86 = sadd.s32 %s85, 1
      %s87 = scalar_select %p84, %s85, %s86
      %p90 = pneg %p84
      %p91 = scmp.eq.s32.totalorder %s16, 1
      %p92 = por %p90, %p91
      %p93 = scmp.ne.s32.totalorder %s85, %s88
      %p94 = scmp.eq.s32.totalorder %s16, 0
      %p95 = por %p93, %p94
      %p96 = scmp.ne.s32.totalorder %s85, %s88
      %p97 = scmp.eq.s32.totalorder %s21, 1
      %p98 = por %p96, %p97
      %p99 = scmp.ne.s32.totalorder %s88, %s89
      %p100 = scmp.eq.s32.totalorder %s21, 0
      %p101 = por %p99, %p100
      %p102 = scmp.ne.s32.totalorder %s88, %s89
      %p103 = scmp.eq.s32.totalorder %s22, 1
      %p104 = por %p102, %p103
      %p106 = scmp.ne.s32.totalorder %s89, %s105
      %p107 = scmp.eq.s32.totalorder %s22, 0
      %p108 = por %p106, %p107
      %s109 = ssub.s32 %s23, %s35
      %s110 = ssub.s32 %s24, %s31
      %s111 = sor.u32 %s109, %s110
      %p112 = scmp.eq.s32.totalorder %s111, 0
      %s114 = sadd.s32 %s113, 1
      %s115 = scalar_select %p112, %s113, %s114
      %p118 = pneg %p112
      %p119 = scmp.eq.s32.totalorder %s16, 1
      %p120 = por %p118, %p119
      %p121 = scmp.ne.s32.totalorder %s113, %s116
      %p122 = scmp.eq.s32.totalorder %s16, 0
      %p123 = por %p121, %p122
      %p124 = scmp.ne.s32.totalorder %s113, %s116
      %p125 = scmp.eq.s32.totalorder %s21, 1
      %p126 = por %p124, %p125
      %p127 = scmp.ne.s32.totalorder %s116, %s117
      %p128 = scmp.eq.s32.totalorder %s21, 0
      %p129 = por %p127, %p128
      %p130 = scmp.ne.s32.totalorder %s116, %s117
      %p131 = scmp.eq.s32.totalorder %s22, 1
      %p132 = por %p130, %p131
      %p134 = scmp.ne.s32.totalorder %s117, %s133
      %p135 = scmp.eq.s32.totalorder %s22, 0
      %p136 = por %p134, %p135
      %p137 = scmp.le.s32.totalorder 1, %s16
      %p138 = scmp.lt.s32.totalorder %s16, 3
      %p139 = pnand %p137, %p138
      %p140 = pneg %p139
      // Predicated region
      $region9: #{tpu_custom_call.1} parent=5 // pred_check
        _
      $region10: #{tpu_custom_call.1} parent=5 // pred_check_branch
        %142 = sbr.rel (%p139) target = $region12
      $region11: #{tpu_custom_call.1} parent=5 // pred_region
        %s143 = ssub.s32 %s16, 1
        // Predicated region
        $region13: #{tpu_custom_call.1} parent=11 // pred_check
          %p144 = pneg %p75
        $region14: #{tpu_custom_call.1} parent=11 // pred_check_branch
          %146 = sbr.rel (%p144) target = $region16
        $region15: #{tpu_custom_call.1} parent=11 // pred_region
          %148 = vsyncadd [#allocation6], 0
          %s149 = sshll.u32 %s1, 4
          %s150 = int_to_ptr.hbm [resolvable:$true] %s149
          %s151 = sshll.u32 [#allocation5], 4
          %s152 = int_to_ptr.vmem [resolvable:$true] %s151
          %157 = dma.hbm_to_vmem [thread:$0]  %s150, 2048, %s152, [#allocation6], 64, 64, 4
        $region16: #{tpu_custom_call.1} parent=11 // pred_fallthru
          _
        // Predicated region
        $region17: #{tpu_custom_call.1} parent=11 // pred_check
          %p158 = pneg %p101
        $region18: #{tpu_custom_call.1} parent=11 // pred_check_branch
          %160 = sbr.rel (%p158) target = $region20
        $region19: #{tpu_custom_call.1} parent=11 // pred_region
          %s161 = smul.u32 2, %s26
          %163 = vsyncadd [#allocation6], 0
          %s164 = scalar_lea.hbm %s2, %s161
          %s166 = sshll.u32 %s164, 4
          %s167 = int_to_ptr.hbm [resolvable:$true] %s166
          %s168 = sshll.u32 [#allocation7], 4
          %s169 = int_to_ptr.vmem [resolvable:$true] %s168
          %171 = dma.hbm_to_vmem [thread:$0]  %s167, 32, %s169, [#allocation6]
        $region20: #{tpu_custom_call.1} parent=11 // pred_fallthru
          _
      $region12: #{tpu_custom_call.1} parent=5 // pred_fallthru
        _
      %p172 = scmp.lt.s32.totalorder %s16, 2
      // Predicated region
      $region21: #{tpu_custom_call.1} parent=5 // pred_check
        %p173 = pneg %p172
      $region22: #{tpu_custom_call.1} parent=5 // pred_check_branch
        %175 = sbr.rel (%p173) target = $region24
      $region23: #{tpu_custom_call.1} parent=5 // pred_region
        // Predicated region
        $region25: #{tpu_custom_call.1} parent=23 // pred_check
          %p176 = pneg %p48
        $region26: #{tpu_custom_call.1} parent=23 // pred_check_branch
          %178 = sbr.rel (%p176) target = $region28
        $region27: #{tpu_custom_call.1} parent=23 // pred_region
          %s179 = sand.u32 %s38, 1
          %s180 = scalar_lea.sflag [#allocation3], %s179
          %s181 = sand.u32 %s38, 1
          %s182 = smul.addr %s181, 4
          %s183 = scalar_lea.vmem [#allocation2], %s182
          %185 = vsyncadd %s180, 0
          %s186 = smul.addr %s23, 4
          %s187 = scalar_lea.hbm %s0, %s186
          %s189 = sshll.u32 %s187, 4
          %s190 = int_to_ptr.hbm [resolvable:$true] %s189
          %s191 = sshll.u32 %s183, 4
          %s192 = int_to_ptr.vmem [resolvable:$true] %s191
          %194 = dma.hbm_to_vmem [thread:$0]  %s190, 64, %s192, %s180
        $region28: #{tpu_custom_call.1} parent=23 // pred_fallthru
          _
      $region24: #{tpu_custom_call.1} parent=5 // pred_fallthru
        _
      %p195 = scmp.le.s32.totalorder 1, %s16
      %p196 = scmp.lt.s32.totalorder %s16, 3
      %p197 = pnand %p195, %p196
      %p198 = pneg %p197
      // Predicated region
      $region29: #{tpu_custom_call.1} parent=5 // pred_check
        _
      $region30: #{tpu_custom_call.1} parent=5 // pred_check_branch
        %200 = sbr.rel (%p197) target = $region32
      $region31: #{tpu_custom_call.1} parent=5 // pred_region
        %s201 = ssub.s32 %s16, 1
        %s202 = sand.u32 %s41, 1
        %s203 = scalar_lea.sflag [#allocation3], %s202
        %s204 = sand.u32 %s41, 1
        %s205 = smul.addr %s204, 4
        %s206 = scalar_lea.vmem [#allocation2], %s205
        // Predicated region
        $region33: #{tpu_custom_call.1} parent=31 // pred_check
          %p207 = pneg %p54
        $region34: #{tpu_custom_call.1} parent=31 // pred_check_branch
          %209 = sbr.rel (%p207) target = $region36
        $region35: #{tpu_custom_call.1} parent=31 // pred_region
          %211 = dma.done %s203, 64
        $region36: #{tpu_custom_call.1} parent=31 // pred_fallthru
          _
        // Predicated region
        $region37: #{tpu_custom_call.1} parent=31 // pred_check
          %p212 = pneg %p75
        $region38: #{tpu_custom_call.1} parent=31 // pred_check_branch
          %214 = sbr.rel (%p212) target = $region40
        $region39: #{tpu_custom_call.1} parent=31 // pred_region
          %216 = dma.done [#allocation6], 2048
        $region40: #{tpu_custom_call.1} parent=31 // pred_fallthru
          _
        // Predicated region
        $region41: #{tpu_custom_call.1} parent=31 // pred_check
          %p217 = pneg %p101
        $region42: #{tpu_custom_call.1} parent=31 // pred_check_branch
          %219 = sbr.rel (%p217) target = $region44
        $region43: #{tpu_custom_call.1} parent=31 // pred_region
          %221 = dma.done [#allocation6], 32
        $region44: #{tpu_custom_call.1} parent=31 // pred_fallthru
          _
        %s222 = sand.u32 %s41, 1
        %s223 = scalar_lea.sflag [#allocation3], %s222
        %s224 = sand.u32 %s41, 1
        %s225 = smul.addr %s224, 4
        %s226 = scalar_lea.vmem [#allocation2], %s225
        %p227 = pneg %p54
        %p228 = pneg %p51
        %p229 = pneg %p75
        %p230 = pneg %p72
        %p231 = pneg %p101
        %p232 = pneg %p98
        %p233 = pneg %p129
        %p234 = pneg %p126
        %s235 = sand.u32 %s116, 1
        %s236 = scalar_lea.sflag [#allocation4], %s235
        %s237 = sand.u32 %s116, 1
        %s238 = smul.addr %s237, 16
        %s239 = scalar_lea.vmem [#allocation8], %s238
        %s240 = smul.u32 2, %s26
        %s241 = smul.u32 2, %s26
        %s242 = smul.u32 %s26, 256
        %s243 = sshra.s32 %s242, 3
        %s244 = sand.u32 %s242, 7
        %s245 = smul.addr %s243, 4
        %s246 = scalar_lea.vmem [#allocation5], %s245
        %v247 = vld [vmem:[%s246] sm:$0xf]
        %v248 = vld [vmem:[%s246 + $0x4] sm:$0xf]
        %v249 = vld [vmem:[%s246 + $0x8] sm:$0xf]
        %v250 = vld [vmem:[%s246 + $0xc] sm:$0xf]
        %v251 = vld [vmem:[%s246 + $0x10] sm:$0xf]
        %v252 = vld [vmem:[%s246 + $0x14] sm:$0xf]
        %v253 = vld [vmem:[%s246 + $0x18] sm:$0xf]
        %v254 = vld [vmem:[%s246 + $0x1c] sm:$0xf]
        %v255 = vld [vmem:[%s246 + $0x20] sm:$0xf]
        %v256 = vld [vmem:[%s246 + $0x24] sm:$0xf]
        %v257 = vld [vmem:[%s246 + $0x28] sm:$0xf]
        %v258 = vld [vmem:[%s246 + $0x2c] sm:$0xf]
        %v259 = vld [vmem:[%s246 + $0x30] sm:$0xf]
        %v260 = vld [vmem:[%s246 + $0x34] sm:$0xf]
        %v261 = vld [vmem:[%s246 + $0x38] sm:$0xf]
        %v262 = vld [vmem:[%s246 + $0x3c] sm:$0xf]
        %v263 = vld [vmem:[%s246 + $0x40] sm:$0xf]
        %v264 = vld [vmem:[%s246 + $0x44] sm:$0xf]
        %v265 = vld [vmem:[%s246 + $0x48] sm:$0xf]
        %v266 = vld [vmem:[%s246 + $0x4c] sm:$0xf]
        %v267 = vld [vmem:[%s246 + $0x50] sm:$0xf]
        %v268 = vld [vmem:[%s246 + $0x54] sm:$0xf]
        %v269 = vld [vmem:[%s246 + $0x58] sm:$0xf]
        %v270 = vld [vmem:[%s246 + $0x5c] sm:$0xf]
        %v271 = vld [vmem:[%s246 + $0x60] sm:$0xf]
        %v272 = vld [vmem:[%s246 + $0x64] sm:$0xf]
        %v273 = vld [vmem:[%s246 + $0x68] sm:$0xf]
        %v274 = vld [vmem:[%s246 + $0x6c] sm:$0xf]
        %v275 = vld [vmem:[%s246 + $0x70] sm:$0xf]
        %v276 = vld [vmem:[%s246 + $0x74] sm:$0xf]
        %v277 = vld [vmem:[%s246 + $0x78] sm:$0xf]
        %v278 = vld [vmem:[%s246 + $0x7c] sm:$0xf]
        %v279 = vld [vmem:[%s206] sm:$0xf]
        %v280 = vld [vmem:[#allocation7] sm:$0x3]
        %v282 = vperm.slane %v280, 0
        %v283 = vperm.slane %v280, 1
        %v318 = vunpack.c.l.b16 %v247
        %v319 = vunpack.c.l.b16 %v248
        %v320 = vunpack.c.l.b16 %v249
        %v321 = vunpack.c.l.b16 %v250
        %v322 = vunpack.c.l.b16 %v251
        %v323 = vunpack.c.l.b16 %v252
        %v324 = vunpack.c.l.b16 %v253
        %v325 = vunpack.c.l.b16 %v254
        %v326 = vunpack.c.l.b16 %v255
        %v327 = vunpack.c.l.b16 %v256
        %v328 = vunpack.c.l.b16 %v257
        %v329 = vunpack.c.l.b16 %v258
        %v330 = vunpack.c.l.b16 %v259
        %v331 = vunpack.c.l.b16 %v260
        %v332 = vunpack.c.l.b16 %v261
        %v333 = vunpack.c.l.b16 %v262
        %v334 = vunpack.c.l.b16 %v263
        %v335 = vunpack.c.l.b16 %v264
        %v336 = vunpack.c.l.b16 %v265
        %v337 = vunpack.c.l.b16 %v266
        %v338 = vunpack.c.l.b16 %v267
        %v339 = vunpack.c.l.b16 %v268
        %v340 = vunpack.c.l.b16 %v269
        %v341 = vunpack.c.l.b16 %v270
        %v342 = vunpack.c.l.b16 %v271
        %v343 = vunpack.c.l.b16 %v272
        %v344 = vunpack.c.l.b16 %v273
        %v345 = vunpack.c.l.b16 %v274
        %v346 = vunpack.c.l.b16 %v275
        %v347 = vunpack.c.l.b16 %v276
        %v348 = vunpack.c.l.b16 %v277
        %v349 = vunpack.c.l.b16 %v278
        %v350 = vpack.c.b16 %v319, %v318
        %v351 = vpack.c.b16 %v321, %v320
        %v352 = vpack.c.b16 %v323, %v322
        %v353 = vpack.c.b16 %v325, %v324
        %v354 = vpack.c.b16 %v327, %v326
        %v355 = vpack.c.b16 %v329, %v328
        %v356 = vpack.c.b16 %v331, %v330
        %v357 = vpack.c.b16 %v333, %v332
        %v358 = vpack.c.b16 %v335, %v334
        %v359 = vpack.c.b16 %v337, %v336
        %v360 = vpack.c.b16 %v339, %v338
        %v361 = vpack.c.b16 %v341, %v340
        %v362 = vpack.c.b16 %v343, %v342
        %v363 = vpack.c.b16 %v345, %v344
        %v364 = vpack.c.b16 %v347, %v346
        %v365 = vpack.c.b16 %v349, %v348
        %382 = vmatpush.bf16.xpose.msra.mxu0 %v357
        %383 = vmatpush.bf16.xpose.msra.mxu0 %v356
        %384 = vmatpush.bf16.xpose.msra.mxu0 %v355
        %385 = vmatpush.bf16.xpose.msra.mxu0 %v354
        %386 = vmatpush.bf16.xpose.msra.mxu0 %v353
        %387 = vmatpush.bf16.xpose.msra.mxu0 %v352
        %388 = vmatpush.bf16.xpose.msra.mxu0 %v351
        %389 = vmatpush.bf16.xpose.msra.mxu0 %v350
        %390 = vmatmul.bf16.gmra.mxu0 %v279
        %v391 = vpop.f32.mrf.mxu0
        %v392 = vadd.f32 %v282, %v391
        %v393 = vpop.f32.mrf.mxu0
        %394 = vdwg.mxu0
        %395 = vmatpush.bf16.xpose.msra.mxu0 %v365
        %396 = vmatpush.bf16.xpose.msra.mxu0 %v364
        %397 = vmatpush.bf16.xpose.msra.mxu0 %v363
        %398 = vmatpush.bf16.xpose.msra.mxu0 %v362
        %399 = vmatpush.bf16.xpose.msra.mxu0 %v361
        %400 = vmatpush.bf16.xpose.msra.mxu0 %v360
        %401 = vmatpush.bf16.xpose.msra.mxu0 %v359
        %402 = vmatpush.bf16.xpose.msra.mxu0 %v358
        %403 = vmatmul.bf16.gmra.mxu0 %v279
        %v404 = vpop.f32.mrf.mxu0
        %v405 = vadd.f32 %v283, %v404
        %v406 = vpop.f32.mrf.mxu0
        %407 = vdwg.mxu0
        %408 = vst [vmem:[%s239] sm:$0xff] %v392
        %409 = vst [vmem:[%s239 + $0x8] sm:$0xff] %v405
        %s410 = sand.u32 %s116, 1
        %s411 = scalar_lea.sflag [#allocation4], %s410
        %s412 = sand.u32 %s116, 1
        %s413 = smul.addr %s412, 16
        %s414 = scalar_lea.vmem [#allocation8], %s413
        // Predicated region
        $region45: #{tpu_custom_call.1} parent=31 // pred_check
          %p415 = pneg %p126
        $region46: #{tpu_custom_call.1} parent=31 // pred_check_branch
          %417 = sbr.rel (%p415) target = $region48
        $region47: #{tpu_custom_call.1} parent=31 // pred_region
          %s418 = smul.u32 2, %s26
          %420 = vsyncadd %s411, 0
          %s421 = smul.addr %s25, 2
          %s422 = sadd.s32 %s418, %s421
          %s423 = smul.addr %s422, 8
          %s424 = scalar_lea.hbm %s3, %s423
          %s426 = sshll.u32 %s414, 4
          %s427 = int_to_ptr.vmem [resolvable:$true] %s426
          %s428 = sshll.u32 %s424, 4
          %s429 = int_to_ptr.hbm [resolvable:$true] %s428
          %431 = dma.vmem_to_hbm [thread:$0]  %s427, 256, %s429, %s411
        $region48: #{tpu_custom_call.1} parent=31 // pred_fallthru
          _
      $region32: #{tpu_custom_call.1} parent=5 // pred_fallthru
        _
      %p432 = scmp.le.s32.totalorder 2, %s16
      // Predicated region
      $region49: #{tpu_custom_call.1} parent=5 // pred_check
        %p433 = pneg %p432
      $region50: #{tpu_custom_call.1} parent=5 // pred_check_branch
        %435 = sbr.rel (%p433) target = $region52
      $region51: #{tpu_custom_call.1} parent=5 // pred_region
        %s436 = ssub.s32 %s16, 2
        // Predicated region
        $region53: #{tpu_custom_call.1} parent=51 // pred_check
          %p437 = pneg %p132
        $region54: #{tpu_custom_call.1} parent=51 // pred_check_branch
          %439 = sbr.rel (%p437) target = $region56
        $region55: #{tpu_custom_call.1} parent=51 // pred_region
          %s440 = sand.u32 %s117, 1
          %s441 = scalar_lea.sflag [#allocation4], %s440
          %s442 = sand.u32 %s117, 1
          %s443 = smul.addr %s442, 16
          %s444 = scalar_lea.vmem [#allocation8], %s443
          %446 = dma.done %s441, 256
        $region56: #{tpu_custom_call.1} parent=51 // pred_fallthru
          _
      $region52: #{tpu_custom_call.1} parent=5 // pred_fallthru
        _
    $region6: #{tpu_custom_call.1} parent=1 // loop_footer
      %s20 = sadd.s32 1, %s16
    $region7: #{tpu_custom_call.1} parent=1 // loop_footer_branch
      %15 = sbr.rel target = $region3
    $region8: #{tpu_custom_call.1} parent=1 // loop_exit
      _
    %447 = vsyncpa [#allocation3], 1
    %s448 = scalar_lea.sflag [#allocation3], 1
    %449 = vsyncpa %s448, 1
    %450 = vsyncpa [#allocation6], 1
    %451 = vsyncpa [#allocation4], 1
    %s452 = scalar_lea.sflag [#allocation4], 1
    %453 = vsyncpa %s452, 1

</llo_original>
